<compile_context>
chip_gen: v7x
topology: tpu7x:2x2x1
jax: 0.10.0
libtpu: 0.0.40
codegen_flags: <defaults>
</compile_context>

<pallas_src>
import functools
import math

import jax
import jax.numpy as jnp
from jax.experimental import pallas as pl
from jax.experimental.pallas import tpu as pltpu


# ----------------------------- Pallas kernel ----------------------------------

def channel_attention_kernel(x_ref, w1_ref, w2_ref, o_ref, sum_ref, max_ref,
                             *, inv_hw):
    """Fused channel attention.

    x_ref  : [1, C, t_hw] or [1, C, t_h, W] block of the activation (one image n)
    w1_ref : [C, C//ratio]  (fc1, 1x1 conv, no bias) -- whole array, VMEM resident
    w2_ref : [C//ratio, C]  (fc2, 1x1 conv, no bias) -- whole array, VMEM resident
    o_ref  : [1, 1, C] attention output for image n (resident across axis 1)
    sum_ref, max_ref : f32 VMEM scratch, same shape as the x block
                       (elementwise running sum / max -> no per-step XLU reduce)
    """
    step = pl.program_id(1)          # spatial reduction step (axis 1 = "arbitrary")

    @pl.when(step == 0)
    def _init():
        sum_ref[...] = jnp.zeros(sum_ref.shape, sum_ref.dtype)
        max_ref[...] = jnp.full(max_ref.shape, -jnp.inf, max_ref.dtype)

    # Steady state: pure VALU accumulate (vld + vadd/vmax), no cross-lane work.
    x = x_ref[...].astype(jnp.float32)
    sum_ref[...] += x
    max_ref[...] = jnp.maximum(max_ref[...], x)

    @pl.when(step == pl.num_programs(1) - 1)
    def _finalize():
        # One-shot cross-lane reduce over the spatial block positions.
        spatial_axes = tuple(range(2, len(sum_ref.shape)))
        avg = jnp.sum(sum_ref[...], axis=spatial_axes) * inv_hw        # [1, C]
        mx = jnp.max(max_ref[...], axis=spatial_axes)                  # [1, C]

        def mlp(v):                                                    # shared MLP
            h = jnp.maximum(
                jnp.dot(v, w1_ref[...], preferred_element_type=jnp.float32), 0.0)
            return jnp.dot(h, w2_ref[...], preferred_element_type=jnp.float32)

        # Run the MLP twice and add (avoids a sublane concat relayout).
        z = mlp(avg) + mlp(mx)                                         # [1, C]
        # sigmoid(z) = 1 / (1 + exp(-z)); exp on EUP, approx reciprocal (free slot)
        o_ref[0] = pl.reciprocal(1.0 + jnp.exp(-z), approx=True)


# ----------------------------- tiling policy -----------------------------------

def _vmem_capacity_bytes(default=64 << 20):
    """Physical VMEM capacity (128 MiB v5e/v6e, 64 MiB v7x); conservative fallback."""
    try:
        cap = int(getattr(pltpu.get_tpu_info(), "vmem_capacity_bytes", 0))
        if cap > 0:
            return max(min(cap, 128 << 20), 32 << 20)
    except Exception:
        pass
    return default


def _pick_lane_tile(hw, c, itemsize, block_budget):
    """Largest multiple-of-128 divisor of hw whose [1, C, t_hw] block fits budget."""
    best = 128
    for d in range(128, hw + 1, 128):
        if hw % d == 0 and c * d * itemsize <= block_budget:
            best = d
    return best


def _pick_row_tile(h, w, c, itemsize, block_budget):
    """Largest multiple-of-8 divisor of h whose [1, C, t_h, W] block fits budget.

    Falls back to the smallest legal tile, or full H (always a legal block shape)
    when H has no multiple-of-8 divisor (e.g. H = 7 / 14 / 28).
    """
    cands = [t for t in range(8, h + 1, 8) if h % t == 0]
    fits = [t for t in cands if c * t * w * itemsize <= block_budget]
    if fits:
        return max(fits)
    if cands:
        return min(cands)          # best effort if even the smallest tile is big
    return h


# ----------------------------- wrapper ------------------------------------------

def channel_attention(x_nchw, w1, w2, *, block_budget_bytes=None):
    """x_nchw: [N, C, H, W]; w1: [C, C//r]; w2: [C//r, C]. Returns [N, C, 1, 1] f32.

    (w1/w2 are the PyTorch 1x1-conv weights with the squeezed kernel dims,
     transposed so the pooled row-vector multiplies them from the left.)
    """
    N, C, H, W = x_nchw.shape
    HW = H * W
    itemsize = jnp.dtype(x_nchw.dtype).itemsize

    # Generation-aware VMEM budgeting. Per-kernel footprint ~ 4x one x block
    # (x double-buffer + f32 sum/max accumulators) + tiny weights/output.
    vmem_cap = _vmem_capacity_bytes()
    usable = min(vmem_cap // 2, 48 << 20)
    block_budget = block_budget_bytes or max(usable // 5, 1 << 20)
    vmem_limit = max(min(vmem_cap - (8 << 20), usable + (16 << 20)), 32 << 20)

    if HW % 128 == 0:
        # Lane-dense path: view x as [N, C, H*W] (free view) and tile the merged
        # spatial axis in lane-aligned multiples of 128.
        t_hw = _pick_lane_tile(HW, C, itemsize, block_budget)
        x_in = x_nchw.reshape(N, C, HW)
        grid = (N, HW // t_hw)
        block_shape = (1, C, t_hw)
        x_spec = pl.BlockSpec(block_shape, lambda n, s: (n, 0, s))
    else:
        # Fallback (HW not 128-aligned): keep x 4-D and tile over H with a
        # full-W block, so large spatial inputs never force a full-HW block
        # into VMEM (previous version's weakness).
        t_h = _pick_row_tile(H, W, C, itemsize, block_budget)
        x_in = x_nchw
        grid = (N, H // t_h)
        block_shape = (1, C, t_h, W)
        x_spec = pl.BlockSpec(block_shape, lambda n, s: (n, 0, s, 0))

    kernel = functools.partial(channel_attention_kernel, inv_hw=1.0 / HW)
    out = pl.pallas_call(
        kernel,
        out_shape=jax.ShapeDtypeStruct((N, 1, C), jnp.float32),
        grid=grid,
        in_specs=[
            x_spec,
            # Tiny weights: whole-array, single VMEM copy for the whole kernel
            # (no per-step double-buffering).
            pl.BlockSpec(memory_space=pltpu.MemorySpace.VMEM),
            pl.BlockSpec(memory_space=pltpu.MemorySpace.VMEM),
        ],
        out_specs=pl.BlockSpec((1, 1, C), lambda n, s: (n, 0, 0)),
        scratch_shapes=[
            pltpu.VMEM(block_shape, jnp.float32),   # running elementwise sum
            pltpu.VMEM(block_shape, jnp.float32),   # running elementwise max
        ],
        compiler_params=pltpu.CompilerParams(
            # Batch axis parallel (v7x megacore sharding; no-op on 1-TC chips),
            # spatial reduction axis arbitrary (carries the accumulators).
            dimension_semantics=("parallel", "arbitrary"),
            vmem_limit_bytes=int(vmem_limit),
        ),
    )(x_in, w1, w2)
    return out.reshape(N, C, 1, 1)                   # match PyTorch [N, C, 1, 1]


# ----------------------------- reference & main ---------------------------------

def _reference(x, w1, w2):
    avg = jnp.mean(x, axis=(2, 3))
    mx = jnp.max(x, axis=(2, 3))

    def mlp(v):
        return jnp.maximum(v @ w1, 0.0) @ w2

    return jax.nn.sigmoid(mlp(avg) + mlp(mx)).reshape(x.shape[0], x.shape[1], 1, 1)


def _make_inputs(key, n, c, h, w, ratio=8):
    kx, k1, k2 = jax.random.split(key, 3)
    ch = c // ratio
    x = jax.random.normal(kx, (n, c, h, w), jnp.float32)
    # PyTorch Conv2d default init ~ U(-1/sqrt(fan_in), 1/sqrt(fan_in)), 1x1, no bias
    b1 = 1.0 / math.sqrt(c)
    w1 = jax.random.uniform(k1, (c, ch), jnp.float32, minval=-b1, maxval=b1)
    b2 = 1.0 / math.sqrt(ch)
    w2 = jax.random.uniform(k2, (ch, c), jnp.float32, minval=-b2, maxval=b2)
    return x, w1, w2


if __name__ == "__main__":
    key = jax.random.PRNGKey(0)
    k0, k1, k2 = jax.random.split(key, 3)

    # Small budgets on cases 2/3 force multi-step reductions so the accumulator
    # init / finalize logic and the 4-D fallback path are exercised on-device.
    cases = [
        (_make_inputs(k0, 2, 64, 16, 16), None),        # lane-merged path, 1 step
        (_make_inputs(k1, 2, 64, 16, 16), 40 * 1024),   # lane-merged path, 2 steps
        (_make_inputs(k2, 2, 64, 16, 12), 32 * 1024),   # 4-D fallback path, 2 steps
    ]

    for (x, w1, w2), budget in cases:
        out = jax.block_until_ready(
            channel_attention(x, w1, w2, block_budget_bytes=budget))
        assert out.shape == (x.shape[0], x.shape[1], 1, 1), out.shape
        assert bool(jnp.all(jnp.isfinite(out)))
        ref = _reference(x, w1, w2)
        err = float(jnp.max(jnp.abs(out - ref)))
        # approx-reciprocal sigmoid => loose (but tight in practice) tolerance
        assert err < 2e-2, err

    print("KERNEL_OK")
</pallas_src>

<mosaic_0001>
module attributes {stable_mosaic.version = 11 : i64} {
  func.func @channel_attention_kernel(%arg0: i32, %arg1: i32, %arg2: memref<1x64x256xf32, #tpu.memory_space<vmem>>, %arg3: memref<64x8xf32, #tpu.memory_space<vmem>>, %arg4: memref<8x64xf32, #tpu.memory_space<vmem>>, %arg5: memref<1x1x64xf32, #tpu.memory_space<vmem>>, %arg6: memref<1x64x256xf32, #tpu.memory_space<vmem>>, %arg7: memref<1x64x256xf32, #tpu.memory_space<vmem>>) attributes {dimension_semantics = [#tpu.dimension_semantics<parallel>, #tpu.dimension_semantics<arbitrary>], iteration_bounds = array<i64: 2, 1>, scalar_prefetch = 0 : i64, scratch_operands = 2 : i64, tpu.core_type = #tpu.core_type<tc>, window_params = [{transform_indices = @transform_0, window_bounds = array<i64: 1, 64, 256>}, {pipeline_mode = #tpu.pipeline_mode<synchronous>, transform_indices = @transform_1, window_bounds = array<i64: 64, 8>}, {pipeline_mode = #tpu.pipeline_mode<synchronous>, transform_indices = @transform_2, window_bounds = array<i64: 8, 64>}, {transform_indices = @transform_3, window_bounds = array<i64: 1, 1, 64>}]} {
    %c0_i32 = arith.constant 0 : i32
    %0 = arith.cmpi eq, %arg1, %c0_i32 : i32
    %1 = arith.extui %0 : i1 to i32
    %c0_i32_0 = arith.constant 0 : i32
    %2 = arith.cmpi ne, %1, %c0_i32_0 : i32
    scf.if %2 {
      %cst = arith.constant 0.000000e+00 : f32
      %13 = vector.broadcast %cst : f32 to vector<1x64x256xf32>
      %c0_17 = arith.constant 0 : index
      %c0_18 = arith.constant 0 : index
      %c0_19 = arith.constant 0 : index
      %14 = vector.load %arg6[%c0_17, %c0_18, %c0_19] : memref<1x64x256xf32, #tpu.memory_space<vmem>>, vector<1x64x256xf32>
      tpu.vector_store %arg6[%c0_17, %c0_18, %c0_19], %13 {strides = array<i32>} : memref<1x64x256xf32, #tpu.memory_space<vmem>>, vector<1x64x256xf32>,
      %cst_20 = arith.constant 0xFF800000 : f32
      %15 = vector.broadcast %cst_20 : f32 to vector<1x64x256xf32>
      %c0_21 = arith.constant 0 : index
      %c0_22 = arith.constant 0 : index
      %c0_23 = arith.constant 0 : index
      %16 = vector.load %arg7[%c0_21, %c0_22, %c0_23] : memref<1x64x256xf32, #tpu.memory_space<vmem>>, vector<1x64x256xf32>
      tpu.vector_store %arg7[%c0_21, %c0_22, %c0_23], %15 {strides = array<i32>} : memref<1x64x256xf32, #tpu.memory_space<vmem>>, vector<1x64x256xf32>,
    } else {
    }
    %c0 = arith.constant 0 : index
    %c0_1 = arith.constant 0 : index
    %c0_2 = arith.constant 0 : index
    %3 = vector.load %arg2[%c0, %c0_1, %c0_2] : memref<1x64x256xf32, #tpu.memory_space<vmem>>, vector<1x64x256xf32>
    %c0_3 = arith.constant 0 : index
    %c0_4 = arith.constant 0 : index
    %c0_5 = arith.constant 0 : index
    %4 = vector.load %arg6[%c0_3, %c0_4, %c0_5] : memref<1x64x256xf32, #tpu.memory_space<vmem>>, vector<1x64x256xf32>
    %5 = arith.addf %4, %3 : vector<1x64x256xf32>
    %c0_6 = arith.constant 0 : index
    %c0_7 = arith.constant 0 : index
    %c0_8 = arith.constant 0 : index
    %6 = vector.load %arg6[%c0_6, %c0_7, %c0_8] : memref<1x64x256xf32, #tpu.memory_space<vmem>>, vector<1x64x256xf32>
    tpu.vector_store %arg6[%c0_6, %c0_7, %c0_8], %5 {strides = array<i32>} : memref<1x64x256xf32, #tpu.memory_space<vmem>>, vector<1x64x256xf32>,
    %c0_9 = arith.constant 0 : index
    %c0_10 = arith.constant 0 : index
    %c0_11 = arith.constant 0 : index
    %7 = vector.load %arg7[%c0_9, %c0_10, %c0_11] : memref<1x64x256xf32, #tpu.memory_space<vmem>>, vector<1x64x256xf32>
    %8 = arith.maximumf %7, %3 : vector<1x64x256xf32>
    %c0_12 = arith.constant 0 : index
    %c0_13 = arith.constant 0 : index
    %c0_14 = arith.constant 0 : index
    %9 = vector.load %arg7[%c0_12, %c0_13, %c0_14] : memref<1x64x256xf32, #tpu.memory_space<vmem>>, vector<1x64x256xf32>
    tpu.vector_store %arg7[%c0_12, %c0_13, %c0_14], %8 {strides = array<i32>} : memref<1x64x256xf32, #tpu.memory_space<vmem>>, vector<1x64x256xf32>,
    %c0_i32_15 = arith.constant 0 : i32
    %10 = arith.cmpi eq, %arg1, %c0_i32_15 : i32
    %11 = arith.extui %10 : i1 to i32
    %c0_i32_16 = arith.constant 0 : i32
    %12 = arith.cmpi ne, %11, %c0_i32_16 : i32
    scf.if %12 {
      %c0_17 = arith.constant 0 : index
      %c0_18 = arith.constant 0 : index
      %c0_19 = arith.constant 0 : index
      %13 = vector.load %arg6[%c0_17, %c0_18, %c0_19] : memref<1x64x256xf32, #tpu.memory_space<vmem>>, vector<1x64x256xf32>
      %cst = arith.constant dense<0.000000e+00> : vector<1x64xf32>
      %14 = vector.multi_reduction <add>, %13, %cst [2] : vector<1x64x256xf32> to vector<1x64xf32>
      %cst_20 = arith.constant 3.906250e-03 : f32
      %15 = vector.broadcast %cst_20 : f32 to vector<1x64xf32>
      %16 = arith.mulf %14, %15 : vector<1x64xf32>
      %c0_21 = arith.constant 0 : index
      %c0_22 = arith.constant 0 : index
      %c0_23 = arith.constant 0 : index
      %17 = vector.load %arg7[%c0_21, %c0_22, %c0_23] : memref<1x64x256xf32, #tpu.memory_space<vmem>>, vector<1x64x256xf32>
      %cst_24 = arith.constant dense<0xFF800000> : vector<1x64xf32>
      %18 = vector.multi_reduction <maximumf>, %17, %cst_24 [2] : vector<1x64x256xf32> to vector<1x64xf32>
      %c0_25 = arith.constant 0 : index
      %c0_26 = arith.constant 0 : index
      %19 = vector.load %arg3[%c0_25, %c0_26] : memref<64x8xf32, #tpu.memory_space<vmem>>, vector<64x8xf32>
      %cst_27 = arith.constant dense<0.000000e+00> : vector<1x8xf32>
      %20 = tpu.matmul %16, %19, %cst_27 {dimension_numbers = #tpu.dot_dimension_numbers<[1], [0], [0], [1], [0, 0, 1, 1], [], []>} : vector<1x64xf32>, vector<64x8xf32>, vector<1x8xf32> -> vector<1x8xf32>
      %cst_28 = arith.constant 0.000000e+00 : f32
      %21 = vector.broadcast %cst_28 : f32 to vector<1x8xf32>
      %22 = arith.maximumf %20, %21 : vector<1x8xf32>
      %c0_29 = arith.constant 0 : index
      %c0_30 = arith.constant 0 : index
      %23 = vector.load %arg4[%c0_29, %c0_30] : memref<8x64xf32, #tpu.memory_space<vmem>>, vector<8x64xf32>
      %cst_31 = arith.constant dense<0.000000e+00> : vector<1x64xf32>
      %24 = tpu.matmul %22, %23, %cst_31 {dimension_numbers = #tpu.dot_dimension_numbers<[1], [0], [0], [1], [0, 0, 1, 1], [], []>} : vector<1x8xf32>, vector<8x64xf32>, vector<1x64xf32> -> vector<1x64xf32>
      %c0_32 = arith.constant 0 : index
      %c0_33 = arith.constant 0 : index
      %25 = vector.load %arg3[%c0_32, %c0_33] : memref<64x8xf32, #tpu.memory_space<vmem>>, vector<64x8xf32>
      %cst_34 = arith.constant dense<0.000000e+00> : vector<1x8xf32>
      %26 = tpu.matmul %18, %25, %cst_34 {dimension_numbers = #tpu.dot_dimension_numbers<[1], [0], [0], [1], [0, 0, 1, 1], [], []>} : vector<1x64xf32>, vector<64x8xf32>, vector<1x8xf32> -> vector<1x8xf32>
      %cst_35 = arith.constant 0.000000e+00 : f32
      %27 = vector.broadcast %cst_35 : f32 to vector<1x8xf32>
      %28 = arith.maximumf %26, %27 : vector<1x8xf32>
      %c0_36 = arith.constant 0 : index
      %c0_37 = arith.constant 0 : index
      %29 = vector.load %arg4[%c0_36, %c0_37] : memref<8x64xf32, #tpu.memory_space<vmem>>, vector<8x64xf32>
      %cst_38 = arith.constant dense<0.000000e+00> : vector<1x64xf32>
      %30 = tpu.matmul %28, %29, %cst_38 {dimension_numbers = #tpu.dot_dimension_numbers<[1], [0], [0], [1], [0, 0, 1, 1], [], []>} : vector<1x8xf32>, vector<8x64xf32>, vector<1x64xf32> -> vector<1x64xf32>
      %31 = arith.addf %24, %30 : vector<1x64xf32>
      %cst_39 = arith.constant 0.000000e+00 : f32
      %32 = vector.broadcast %cst_39 : f32 to vector<1x64xf32>
      %33 = arith.subf %32, %31 : vector<1x64xf32>
      %34 = math.exp %33 : vector<1x64xf32>
      %cst_40 = arith.constant 1.000000e+00 : f32
      %35 = vector.broadcast %cst_40 : f32 to vector<1x64xf32>
      %36 = arith.addf %35, %34 : vector<1x64xf32>
      %37 = tpu.reciprocal %36 {approx = true} : vector<1x64xf32> -> vector<1x64xf32>
      %c0_41 = arith.constant 0 : index
      %c0_42 = arith.constant 0 : index
      %c0_43 = arith.constant 0 : index
      %38 = vector.load %arg5[%c0_41, %c0_42, %c0_43] : memref<1x1x64xf32, #tpu.memory_space<vmem>>, vector<1x1x64xf32>
      %39 = vector.shape_cast %38 : vector<1x1x64xf32> to vector<1x64xf32>
      %40 = vector.shape_cast %37 : vector<1x64xf32> to vector<1x1x64xf32>
      tpu.vector_store %arg5[%c0_41, %c0_42, %c0_43], %40 {strides = array<i32>} : memref<1x1x64xf32, #tpu.memory_space<vmem>>, vector<1x1x64xf32>,
    } else {
    }
    return
  }
  func.func @transform_0(%arg0: i32, %arg1: i32) -> (i32, i32, i32) {
    %c0_i32 = arith.constant 0 : i32
    %c0_i32_0 = arith.constant 0 : i32
    return %arg0, %c0_i32, %arg1 : i32, i32, i32
  }
  func.func @transform_1(%arg0: i32, %arg1: i32) -> (i32, i32) {
    %c0_i32 = arith.constant 0 : i32
    %c0_i32_0 = arith.constant 0 : i32
    %c0_i32_1 = arith.constant 0 : i32
    return %c0_i32, %c0_i32_0 : i32, i32
  }
  func.func @transform_2(%arg0: i32, %arg1: i32) -> (i32, i32) {
    %c0_i32 = arith.constant 0 : i32
    %c0_i32_0 = arith.constant 0 : i32
    %c0_i32_1 = arith.constant 0 : i32
    return %c0_i32, %c0_i32_0 : i32, i32
  }
  func.func @transform_3(%arg0: i32, %arg1: i32) -> (i32, i32, i32) {
    %c0_i32 = arith.constant 0 : i32
    %c0_i32_0 = arith.constant 0 : i32
    %c0_i32_1 = arith.constant 0 : i32
    return %arg0, %c0_i32, %c0_i32_0 : i32, i32, i32
  }
}

</mosaic_0001>

<llo_original>
// kernel: tpu_custom_call.1
$region0: #{tpu_custom_call.1}
  #allocation0 [shape = 'u32[]', space=smem, size = 0x4, offset = 0x4, fixed_abs, tag = 'smem constant byte address 0x4 - core index']
  #allocation1 [shape = 'u32[144,128]{1,0:T(1,128)}', space=vmem, size = 0x12000, scoped, tag = 'internal scratch']
  #allocation2 [shape = 'f32[1,64,256]{2,1,0:T(8,128)}', space=vmem, size = 0x10000, scoped, tag = 'scratch operand']
  #allocation3 [shape = 'f32[1,64,256]{2,1,0:T(8,128)}', space=vmem, size = 0x10000, scoped, tag = 'scratch operand']
  %s0 = inlined_call_operand.hbm [shape: f32[2,64,256], index: 0, kind: input, shape index: {}]
  %s1 = inlined_call_operand.vmem [shape: f32[64,8], index: 1, kind: input, shape index: {}]
  %s2 = inlined_call_operand.vmem [shape: f32[8,64], index: 2, kind: input, shape index: {}]
  %s3 = inlined_call_operand.hbm [shape: f32[2,1,64], index: 3, kind: output, shape index: {}]
  %s4 = sld [smem:[#allocation0]]
  $region57: #{tpu_custom_call.1} parent=0
    _
  %s6 = ssub.s32 1, %s4
  %s7 = scalar_select 0, %s6, %s4
  $region1: #{tpu_custom_call.1} parent=0
    #allocation4 [shape = 'u8[131072]{0}', space=vmem, size = 0x20000, scoped, tag = 'input window, operand 0']
    #allocation5 [shape = 's32[2]{0}', space=sflag, size = 0x8, scoped, tag = 'scoped memory for tpu_custom_call.1']
    #allocation6 [shape = 's32[2]{0}', space=sflag, size = 0x8, scoped, tag = 'scoped memory for tpu_custom_call.1']
    #allocation7 [shape = 'u8[1024]{0}', space=vmem, size = 0x400, scoped, tag = 'output window, operand 0']
    %8 = vsyncpa [#allocation5], 0
    %s9 = scalar_lea.sflag [#allocation5], 1
    %10 = vsyncpa %s9, 0
    %11 = vsyncpa [#allocation6], 0
    %s12 = scalar_lea.sflag [#allocation6], 1
    %13 = vsyncpa %s12, 0
    loop: start=0, step=1, limit=4
    $region2: #{tpu_custom_call.1} parent=1 // loop_pre_header
      _
    $region3: #{tpu_custom_call.1} parent=1 // loop_header
      %s15 = sphi 0, %s19
      %p16 = scmp.ge.s32.totalorder %s15, 4
      %s22 = sphi 0, %s34
      %s23 = sphi 0, %s30
      %s24 = sphi 0, %s22
      %s25 = sphi 0, %s23
      %s26 = sphi 0, %s24
      %s27 = sphi 0, %s25
      %s39 = sphi 0, %s41
      %s42 = sphi 0, %s39
      %s43 = sphi 0, %s42
      %s59 = sphi 0, %s43
      %s63 = sphi 0, %s63
      %s65 = sphi 0, %s63
      %s66 = sphi 0, %s65
      %s80 = sphi 0, %s66
      %s84 = sphi 0, %s84
      %s86 = sphi 0, %s84
      %s87 = sphi 0, %s86
      %s101 = sphi 0, %s87
      %s107 = sphi 0, %s109
      %s110 = sphi 0, %s107
      %s111 = sphi 0, %s110
      %s127 = sphi 0, %s111
    $region4: #{tpu_custom_call.1} parent=1 // loop_header_branch
      %18 = sbr.rel (%p16) target = $region8
    $region5: #{tpu_custom_call.1} parent=1 // loop_body
      %s20 = ssub.s32 %s15, 1
      %s21 = ssub.s32 %s15, 2
      %s28 = sadd.s32 1, %s23
      %p29 = scmp.ge.s32.totalorder %s28, 1
      %s30 = scalar_select %p29, 0, %s28
      %s31 = sadd.s32 1, %s22
      %s32 = scalar_select %p29, %s31, %s22
      %p33 = scmp.ge.s32.totalorder %s32, 2
      %s34 = scalar_select %p33, 0, %s32
      %s35 = ssub.s32 %s22, %s34
      %s36 = ssub.s32 %s23, %s30
      %s37 = sor.u32 %s35, %s36
      %p38 = scmp.eq.s32.totalorder %s37, 0
      %s40 = sadd.s32 %s39, 1
      %s41 = scalar_select %p38, %s39, %s40
      %p44 = pneg %p38
      %p45 = scmp.eq.s32.totalorder %s15, 1
      %p46 = por %p44, %p45
      %p47 = scmp.ne.s32.totalorder %s39, %s42
      %p48 = scmp.eq.s32.totalorder %s15, 0
      %p49 = por %p47, %p48
      %p50 = scmp.ne.s32.totalorder %s39, %s42
      %p51 = scmp.eq.s32.totalorder %s20, 1
      %p52 = por %p50, %p51
      %p53 = scmp.ne.s32.totalorder %s42, %s43
      %p54 = scmp.eq.s32.totalorder %s20, 0
      %p55 = por %p53, %p54
      %p56 = scmp.ne.s32.totalorder %s42, %s43
      %p57 = scmp.eq.s32.totalorder %s21, 1
      %p58 = por %p56, %p57
      %p60 = scmp.ne.s32.totalorder %s43, %s59
      %p61 = scmp.eq.s32.totalorder %s21, 0
      %p62 = por %p60, %p61
      %s64 = sadd.s32 %s63, 1
      %p67 = scmp.eq.s32.totalorder %s15, 1
      %p68 = scmp.ne.s32.totalorder %s63, %s65
      %p69 = scmp.eq.s32.totalorder %s15, 0
      %p70 = por %p68, %p69
      %p71 = scmp.ne.s32.totalorder %s63, %s65
      %p72 = scmp.eq.s32.totalorder %s20, 1
      %p73 = por %p71, %p72
      %p74 = scmp.ne.s32.totalorder %s65, %s66
      %p75 = scmp.eq.s32.totalorder %s20, 0
      %p76 = por %p74, %p75
      %p77 = scmp.ne.s32.totalorder %s65, %s66
      %p78 = scmp.eq.s32.totalorder %s21, 1
      %p79 = por %p77, %p78
      %p81 = scmp.ne.s32.totalorder %s66, %s80
      %p82 = scmp.eq.s32.totalorder %s21, 0
      %p83 = por %p81, %p82
      %s85 = sadd.s32 %s84, 1
      %p88 = scmp.eq.s32.totalorder %s15, 1
      %p89 = scmp.ne.s32.totalorder %s84, %s86
      %p90 = scmp.eq.s32.totalorder %s15, 0
      %p91 = por %p89, %p90
      %p92 = scmp.ne.s32.totalorder %s84, %s86
      %p93 = scmp.eq.s32.totalorder %s20, 1
      %p94 = por %p92, %p93
      %p95 = scmp.ne.s32.totalorder %s86, %s87
      %p96 = scmp.eq.s32.totalorder %s20, 0
      %p97 = por %p95, %p96
      %p98 = scmp.ne.s32.totalorder %s86, %s87
      %p99 = scmp.eq.s32.totalorder %s21, 1
      %p100 = por %p98, %p99
      %p102 = scmp.ne.s32.totalorder %s87, %s101
      %p103 = scmp.eq.s32.totalorder %s21, 0
      %p104 = por %p102, %p103
      %s105 = ssub.s32 %s22, %s34
      %p106 = scmp.eq.s32.totalorder %s105, 0
      %s108 = sadd.s32 %s107, 1
      %s109 = scalar_select %p106, %s107, %s108
      %p112 = pneg %p106
      %p113 = scmp.eq.s32.totalorder %s15, 1
      %p114 = por %p112, %p113
      %p115 = scmp.ne.s32.totalorder %s107, %s110
      %p116 = scmp.eq.s32.totalorder %s15, 0
      %p117 = por %p115, %p116
      %p118 = scmp.ne.s32.totalorder %s107, %s110
      %p119 = scmp.eq.s32.totalorder %s20, 1
      %p120 = por %p118, %p119
      %p121 = scmp.ne.s32.totalorder %s110, %s111
      %p122 = scmp.eq.s32.totalorder %s20, 0
      %p123 = por %p121, %p122
      %p124 = scmp.ne.s32.totalorder %s110, %s111
      %p125 = scmp.eq.s32.totalorder %s21, 1
      %p126 = por %p124, %p125
      %p128 = scmp.ne.s32.totalorder %s111, %s127
      %p129 = scmp.eq.s32.totalorder %s21, 0
      %p130 = por %p128, %p129
      %p131 = scmp.le.s32.totalorder 1, %s15
      %p132 = scmp.lt.s32.totalorder %s15, 3
      %p133 = pnand %p131, %p132
      %p134 = pneg %p133
      // Predicated region
      $region9: #{tpu_custom_call.1} parent=5 // pred_check
        _
      $region10: #{tpu_custom_call.1} parent=5 // pred_check_branch
        %136 = sbr.rel (%p133) target = $region12
      $region11: #{tpu_custom_call.1} parent=5 // pred_region
        %s137 = ssub.s32 %s15, 1
        // Predicated region
        $region13: #{tpu_custom_call.1} parent=11 // pred_check
          %p138 = pneg %p76
        $region14: #{tpu_custom_call.1} parent=11 // pred_check_branch
          %140 = sbr.rel (%p138) target = $region16
        $region15: #{tpu_custom_call.1} parent=11 // pred_region
          _
        $region16: #{tpu_custom_call.1} parent=11 // pred_fallthru
          _
        // Predicated region
        $region17: #{tpu_custom_call.1} parent=11 // pred_check
          %p141 = pneg %p97
        $region18: #{tpu_custom_call.1} parent=11 // pred_check_branch
          %143 = sbr.rel (%p141) target = $region20
        $region19: #{tpu_custom_call.1} parent=11 // pred_region
          _
        $region20: #{tpu_custom_call.1} parent=11 // pred_fallthru
          _
      $region12: #{tpu_custom_call.1} parent=5 // pred_fallthru
        _
      %p144 = scmp.lt.s32.totalorder %s15, 2
      // Predicated region
      $region21: #{tpu_custom_call.1} parent=5 // pred_check
        %p145 = pneg %p144
      $region22: #{tpu_custom_call.1} parent=5 // pred_check_branch
        %147 = sbr.rel (%p145) target = $region24
      $region23: #{tpu_custom_call.1} parent=5 // pred_region
        // Predicated region
        $region25: #{tpu_custom_call.1} parent=23 // pred_check
          %p148 = pneg %p49
        $region26: #{tpu_custom_call.1} parent=23 // pred_check_branch
          %150 = sbr.rel (%p148) target = $region28
        $region27: #{tpu_custom_call.1} parent=23 // pred_region
          %s151 = sand.u32 %s39, 1
          %s152 = scalar_lea.sflag [#allocation5], %s151
          %s153 = sand.u32 %s39, 1
          %s154 = smul.addr %s153, 128
          %s155 = scalar_lea.vmem [#allocation4], %s154
          %s156 = smul.u32 2, %s23
          %s158 = ssub.s32 2048, 2048
          %159 = vsyncadd %s152, %s158
          %s160 = smul.addr %s22, 16
          %s161 = sadd.s32 %s156, %s160
          %s162 = smul.addr %s161, 128
          %s163 = scalar_lea.hbm %s0, %s162
          %s164 = sshll.u32 %s155, 4
          %s165 = int_to_ptr.vmem [resolvable:$true] %s164
          %170 = dma.hbm_to_vmem [thread:$0]  %s163, 2048, %s165, %s152, 256, 256, 16
        $region28: #{tpu_custom_call.1} parent=23 // pred_fallthru
          _
      $region24: #{tpu_custom_call.1} parent=5 // pred_fallthru
        _
      %p171 = scmp.le.s32.totalorder 1, %s15
      %p172 = scmp.lt.s32.totalorder %s15, 3
      %p173 = pnand %p171, %p172
      %p174 = pneg %p173
      // Predicated region
      $region29: #{tpu_custom_call.1} parent=5 // pred_check
        _
      $region30: #{tpu_custom_call.1} parent=5 // pred_check_branch
        %176 = sbr.rel (%p173) target = $region32
      $region31: #{tpu_custom_call.1} parent=5 // pred_region
        %s177 = ssub.s32 %s15, 1
        %s178 = sand.u32 %s42, 1
        %s179 = scalar_lea.sflag [#allocation5], %s178
        %s180 = sand.u32 %s42, 1
        %s181 = smul.addr %s180, 128
        %s182 = scalar_lea.vmem [#allocation4], %s181
        // Predicated region
        $region33: #{tpu_custom_call.1} parent=31 // pred_check
          %p183 = pneg %p55
        $region34: #{tpu_custom_call.1} parent=31 // pred_check_branch
          %185 = sbr.rel (%p183) target = $region36
        $region35: #{tpu_custom_call.1} parent=31 // pred_region
          %186 = dma.done %s179, 2048
        $region36: #{tpu_custom_call.1} parent=31 // pred_fallthru
          _
        %s187 = sand.u32 %s42, 1
        %s188 = scalar_lea.sflag [#allocation5], %s187
        %s189 = sand.u32 %s42, 1
        %s190 = smul.addr %s189, 128
        %s191 = scalar_lea.vmem [#allocation4], %s190
        %p192 = pneg %p55
        %p193 = pneg %p52
        %p194 = pneg %p76
        %p195 = pneg %p73
        %p196 = pneg %p97
        %p197 = pneg %p94
        %p198 = pneg %p123
        %p199 = pneg %p120
        %s200 = sand.u32 %s110, 1
        %s201 = scalar_lea.sflag [#allocation6], %s200
        %s202 = sand.u32 %s110, 1
        %s203 = scalar_lea.vmem [#allocation7], %s202
        %s204 = smul.u32 2, %s25
        %p205 = scmp.eq.s32.totalorder %s25, 0
        // Predicated region
        $region37: #{tpu_custom_call.1} parent=31 // pred_check
          %p206 = pneg %p205
        $region38: #{tpu_custom_call.1} parent=31 // pred_check_branch
          %208 = sbr.rel (%p206) target = $region40
        $region39: #{tpu_custom_call.1} parent=31 // pred_region
          %209 = vst [vmem:[#allocation2] sm:$0xff] 0.0
          %210 = vst [vmem:[#allocation2 + $0x8] sm:$0xff] 0.0
          %211 = vst [vmem:[#allocation2 + $0x10] sm:$0xff] 0.0
          %212 = vst [vmem:[#allocation2 + $0x18] sm:$0xff] 0.0
          %213 = vst [vmem:[#allocation2 + $0x20] sm:$0xff] 0.0
          %214 = vst [vmem:[#allocation2 + $0x28] sm:$0xff] 0.0
          %215 = vst [vmem:[#allocation2 + $0x30] sm:$0xff] 0.0
          %216 = vst [vmem:[#allocation2 + $0x38] sm:$0xff] 0.0
          %217 = vst [vmem:[#allocation2 + $0x40] sm:$0xff] 0.0
          %218 = vst [vmem:[#allocation2 + $0x48] sm:$0xff] 0.0
          %219 = vst [vmem:[#allocation2 + $0x50] sm:$0xff] 0.0
          %220 = vst [vmem:[#allocation2 + $0x58] sm:$0xff] 0.0
          %221 = vst [vmem:[#allocation2 + $0x60] sm:$0xff] 0.0
          %222 = vst [vmem:[#allocation2 + $0x68] sm:$0xff] 0.0
          %223 = vst [vmem:[#allocation2 + $0x70] sm:$0xff] 0.0
          %224 = vst [vmem:[#allocation2 + $0x78] sm:$0xff] 0.0
          %225 = vst [vmem:[#allocation3] sm:$0xff] -inf
          %226 = vst [vmem:[#allocation3 + $0x8] sm:$0xff] -inf
          %227 = vst [vmem:[#allocation3 + $0x10] sm:$0xff] -inf
          %228 = vst [vmem:[#allocation3 + $0x18] sm:$0xff] -inf
          %229 = vst [vmem:[#allocation3 + $0x20] sm:$0xff] -inf
          %230 = vst [vmem:[#allocation3 + $0x28] sm:$0xff] -inf
          %231 = vst [vmem:[#allocation3 + $0x30] sm:$0xff] -inf
          %232 = vst [vmem:[#allocation3 + $0x38] sm:$0xff] -inf
          %233 = vst [vmem:[#allocation3 + $0x40] sm:$0xff] -inf
          %234 = vst [vmem:[#allocation3 + $0x48] sm:$0xff] -inf
          %235 = vst [vmem:[#allocation3 + $0x50] sm:$0xff] -inf
          %236 = vst [vmem:[#allocation3 + $0x58] sm:$0xff] -inf
          %237 = vst [vmem:[#allocation3 + $0x60] sm:$0xff] -inf
          %238 = vst [vmem:[#allocation3 + $0x68] sm:$0xff] -inf
          %239 = vst [vmem:[#allocation3 + $0x70] sm:$0xff] -inf
          %240 = vst [vmem:[#allocation3 + $0x78] sm:$0xff] -inf
        $region40: #{tpu_custom_call.1} parent=31 // pred_fallthru
          _
        %v241 = vld [vmem:[%s182] sm:$0xff]
        %v242 = vld [vmem:[%s182 + $0x8] sm:$0xff]
        %v243 = vld [vmem:[%s182 + $0x10] sm:$0xff]
        %v244 = vld [vmem:[%s182 + $0x18] sm:$0xff]
        %v245 = vld [vmem:[%s182 + $0x20] sm:$0xff]
        %v246 = vld [vmem:[%s182 + $0x28] sm:$0xff]
        %v247 = vld [vmem:[%s182 + $0x30] sm:$0xff]
        %v248 = vld [vmem:[%s182 + $0x38] sm:$0xff]
        %v249 = vld [vmem:[%s182 + $0x40] sm:$0xff]
        %v250 = vld [vmem:[%s182 + $0x48] sm:$0xff]
        %v251 = vld [vmem:[%s182 + $0x50] sm:$0xff]
        %v252 = vld [vmem:[%s182 + $0x58] sm:$0xff]
        %v253 = vld [vmem:[%s182 + $0x60] sm:$0xff]
        %v254 = vld [vmem:[%s182 + $0x68] sm:$0xff]
        %v255 = vld [vmem:[%s182 + $0x70] sm:$0xff]
        %v256 = vld [vmem:[%s182 + $0x78] sm:$0xff]
        %v257 = vld [vmem:[#allocation2] sm:$0xff]
        %v258 = vld [vmem:[#allocation2 + $0x8] sm:$0xff]
        %v259 = vld [vmem:[#allocation2 + $0x10] sm:$0xff]
        %v260 = vld [vmem:[#allocation2 + $0x18] sm:$0xff]
        %v261 = vld [vmem:[#allocation2 + $0x20] sm:$0xff]
        %v262 = vld [vmem:[#allocation2 + $0x28] sm:$0xff]
        %v263 = vld [vmem:[#allocation2 + $0x30] sm:$0xff]
        %v264 = vld [vmem:[#allocation2 + $0x38] sm:$0xff]
        %v265 = vld [vmem:[#allocation2 + $0x40] sm:$0xff]
        %v266 = vld [vmem:[#allocation2 + $0x48] sm:$0xff]
        %v267 = vld [vmem:[#allocation2 + $0x50] sm:$0xff]
        %v268 = vld [vmem:[#allocation2 + $0x58] sm:$0xff]
        %v269 = vld [vmem:[#allocation2 + $0x60] sm:$0xff]
        %v270 = vld [vmem:[#allocation2 + $0x68] sm:$0xff]
        %v271 = vld [vmem:[#allocation2 + $0x70] sm:$0xff]
        %v272 = vld [vmem:[#allocation2 + $0x78] sm:$0xff]
        %v273 = vadd.f32 %v257, %v241
        %v274 = vadd.f32 %v258, %v242
        %v275 = vadd.f32 %v259, %v243
        %v276 = vadd.f32 %v260, %v244
        %v277 = vadd.f32 %v261, %v245
        %v278 = vadd.f32 %v262, %v246
        %v279 = vadd.f32 %v263, %v247
        %v280 = vadd.f32 %v264, %v248
        %v281 = vadd.f32 %v265, %v249
        %v282 = vadd.f32 %v266, %v250
        %v283 = vadd.f32 %v267, %v251
        %v284 = vadd.f32 %v268, %v252
        %v285 = vadd.f32 %v269, %v253
        %v286 = vadd.f32 %v270, %v254
        %v287 = vadd.f32 %v271, %v255
        %v288 = vadd.f32 %v272, %v256
        %289 = vst [vmem:[#allocation2] sm:$0xff] %v273
        %290 = vst [vmem:[#allocation2 + $0x8] sm:$0xff] %v274
        %291 = vst [vmem:[#allocation2 + $0x10] sm:$0xff] %v275
        %292 = vst [vmem:[#allocation2 + $0x18] sm:$0xff] %v276
        %293 = vst [vmem:[#allocation2 + $0x20] sm:$0xff] %v277
        %294 = vst [vmem:[#allocation2 + $0x28] sm:$0xff] %v278
        %295 = vst [vmem:[#allocation2 + $0x30] sm:$0xff] %v279
        %296 = vst [vmem:[#allocation2 + $0x38] sm:$0xff] %v280
        %297 = vst [vmem:[#allocation2 + $0x40] sm:$0xff] %v281
        %298 = vst [vmem:[#allocation2 + $0x48] sm:$0xff] %v282
        %299 = vst [vmem:[#allocation2 + $0x50] sm:$0xff] %v283
        %300 = vst [vmem:[#allocation2 + $0x58] sm:$0xff] %v284
        %301 = vst [vmem:[#allocation2 + $0x60] sm:$0xff] %v285
        %302 = vst [vmem:[#allocation2 + $0x68] sm:$0xff] %v286
        %303 = vst [vmem:[#allocation2 + $0x70] sm:$0xff] %v287
        %304 = vst [vmem:[#allocation2 + $0x78] sm:$0xff] %v288
        %v305 = vld [vmem:[#allocation3] sm:$0xff]
        %v306 = vld [vmem:[#allocation3 + $0x8] sm:$0xff]
        %v307 = vld [vmem:[#allocation3 + $0x10] sm:$0xff]
        %v308 = vld [vmem:[#allocation3 + $0x18] sm:$0xff]
        %v309 = vld [vmem:[#allocation3 + $0x20] sm:$0xff]
        %v310 = vld [vmem:[#allocation3 + $0x28] sm:$0xff]
        %v311 = vld [vmem:[#allocation3 + $0x30] sm:$0xff]
        %v312 = vld [vmem:[#allocation3 + $0x38] sm:$0xff]
        %v313 = vld [vmem:[#allocation3 + $0x40] sm:$0xff]
        %v314 = vld [vmem:[#allocation3 + $0x48] sm:$0xff]
        %v315 = vld [vmem:[#allocation3 + $0x50] sm:$0xff]
        %v316 = vld [vmem:[#allocation3 + $0x58] sm:$0xff]
        %v317 = vld [vmem:[#allocation3 + $0x60] sm:$0xff]
        %v318 = vld [vmem:[#allocation3 + $0x68] sm:$0xff]
        %v319 = vld [vmem:[#allocation3 + $0x70] sm:$0xff]
        %v320 = vld [vmem:[#allocation3 + $0x78] sm:$0xff]
        %v321 = vmax.f32 %v305, %v241
        %v322 = vmax.f32 %v306, %v242
        %v323 = vmax.f32 %v307, %v243
        %v324 = vmax.f32 %v308, %v244
        %v325 = vmax.f32 %v309, %v245
        %v326 = vmax.f32 %v310, %v246
        %v327 = vmax.f32 %v311, %v247
        %v328 = vmax.f32 %v312, %v248
        %v329 = vmax.f32 %v313, %v249
        %v330 = vmax.f32 %v314, %v250
        %v331 = vmax.f32 %v315, %v251
        %v332 = vmax.f32 %v316, %v252
        %v333 = vmax.f32 %v317, %v253
        %v334 = vmax.f32 %v318, %v254
        %v335 = vmax.f32 %v319, %v255
        %v336 = vmax.f32 %v320, %v256
        %337 = vst [vmem:[#allocation3] sm:$0xff] %v321
        %338 = vst [vmem:[#allocation3 + $0x8] sm:$0xff] %v322
        %339 = vst [vmem:[#allocation3 + $0x10] sm:$0xff] %v323
        %340 = vst [vmem:[#allocation3 + $0x18] sm:$0xff] %v324
        %341 = vst [vmem:[#allocation3 + $0x20] sm:$0xff] %v325
        %342 = vst [vmem:[#allocation3 + $0x28] sm:$0xff] %v326
        %343 = vst [vmem:[#allocation3 + $0x30] sm:$0xff] %v327
        %344 = vst [vmem:[#allocation3 + $0x38] sm:$0xff] %v328
        %345 = vst [vmem:[#allocation3 + $0x40] sm:$0xff] %v329
        %346 = vst [vmem:[#allocation3 + $0x48] sm:$0xff] %v330
        %347 = vst [vmem:[#allocation3 + $0x50] sm:$0xff] %v331
        %348 = vst [vmem:[#allocation3 + $0x58] sm:$0xff] %v332
        %349 = vst [vmem:[#allocation3 + $0x60] sm:$0xff] %v333
        %350 = vst [vmem:[#allocation3 + $0x68] sm:$0xff] %v334
        %351 = vst [vmem:[#allocation3 + $0x70] sm:$0xff] %v335
        %352 = vst [vmem:[#allocation3 + $0x78] sm:$0xff] %v336
        // Predicated region
        $region41: #{tpu_custom_call.1} parent=31 // pred_check
          %p353 = pneg %p205
        $region42: #{tpu_custom_call.1} parent=31 // pred_check_branch
          %355 = sbr.rel (%p353) target = $region44
        $region43: #{tpu_custom_call.1} parent=31 // pred_region
          %v356 = vld [vmem:[#allocation2] sm:$0xff]
          %v357 = vld [vmem:[#allocation2 + $0x8] sm:$0xff]
          %v358 = vld [vmem:[#allocation2 + $0x10] sm:$0xff]
          %v359 = vld [vmem:[#allocation2 + $0x18] sm:$0xff]
          %v360 = vld [vmem:[#allocation2 + $0x20] sm:$0xff]
          %v361 = vld [vmem:[#allocation2 + $0x28] sm:$0xff]
          %v362 = vld [vmem:[#allocation2 + $0x30] sm:$0xff]
          %v363 = vld [vmem:[#allocation2 + $0x38] sm:$0xff]
          %v364 = vld [vmem:[#allocation2 + $0x40] sm:$0xff]
          %v365 = vld [vmem:[#allocation2 + $0x48] sm:$0xff]
          %v366 = vld [vmem:[#allocation2 + $0x50] sm:$0xff]
          %v367 = vld [vmem:[#allocation2 + $0x58] sm:$0xff]
          %v368 = vld [vmem:[#allocation2 + $0x60] sm:$0xff]
          %v369 = vld [vmem:[#allocation2 + $0x68] sm:$0xff]
          %v370 = vld [vmem:[#allocation2 + $0x70] sm:$0xff]
          %v371 = vld [vmem:[#allocation2 + $0x78] sm:$0xff]
          %v372 = vadd.f32 %v356, %v357
          %373 = vadd.xlane.f32.xlu0 %v372
          %v374 = vpop.xlane.xlu0 %373
          %v375 = vadd.f32 %v358, %v359
          %376 = vadd.xlane.f32.xlu0 %v375
          %v377 = vpop.xlane.xlu0 %376
          %v378 = vadd.f32 %v360, %v361
          %379 = vadd.xlane.f32.xlu0 %v378
          %v380 = vpop.xlane.xlu0 %379
          %v381 = vadd.f32 %v362, %v363
          %382 = vadd.xlane.f32.xlu0 %v381
          %v383 = vpop.xlane.xlu0 %382
          %v384 = vadd.f32 %v364, %v365
          %385 = vadd.xlane.f32.xlu0 %v384
          %v386 = vpop.xlane.xlu0 %385
          %v387 = vadd.f32 %v366, %v367
          %388 = vadd.xlane.f32.xlu0 %v387
          %v389 = vpop.xlane.xlu0 %388
          %v390 = vadd.f32 %v368, %v369
          %391 = vadd.xlane.f32.xlu0 %v390
          %v392 = vpop.xlane.xlu0 %391
          %v393 = vadd.f32 %v370, %v371
          %394 = vadd.xlane.f32.xlu0 %v393
          %v395 = vpop.xlane.xlu0 %394
          %v396 = vmul.f32 %v374, 0.00390625
          %v397 = vmul.f32 %v377, 0.00390625
          %v398 = vmul.f32 %v380, 0.00390625
          %v399 = vmul.f32 %v383, 0.00390625
          %v400 = vmul.f32 %v386, 0.00390625
          %v401 = vmul.f32 %v389, 0.00390625
          %v402 = vmul.f32 %v392, 0.00390625
          %v403 = vmul.f32 %v395, 0.00390625
          %v404 = vld [vmem:[#allocation3] sm:$0xff]
          %v405 = vld [vmem:[#allocation3 + $0x8] sm:$0xff]
          %v406 = vld [vmem:[#allocation3 + $0x10] sm:$0xff]
          %v407 = vld [vmem:[#allocation3 + $0x18] sm:$0xff]
          %v408 = vld [vmem:[#allocation3 + $0x20] sm:$0xff]
          %v409 = vld [vmem:[#allocation3 + $0x28] sm:$0xff]
          %v410 = vld [vmem:[#allocation3 + $0x30] sm:$0xff]
          %v411 = vld [vmem:[#allocation3 + $0x38] sm:$0xff]
          %v412 = vld [vmem:[#allocation3 + $0x40] sm:$0xff]
          %v413 = vld [vmem:[#allocation3 + $0x48] sm:$0xff]
          %v414 = vld [vmem:[#allocation3 + $0x50] sm:$0xff]
          %v415 = vld [vmem:[#allocation3 + $0x58] sm:$0xff]
          %v416 = vld [vmem:[#allocation3 + $0x60] sm:$0xff]
          %v417 = vld [vmem:[#allocation3 + $0x68] sm:$0xff]
          %v418 = vld [vmem:[#allocation3 + $0x70] sm:$0xff]
          %v419 = vld [vmem:[#allocation3 + $0x78] sm:$0xff]
          %v420 = vmax.f32 %v404, %v405
          %421 = vmax.xlane.f32.xlu0 %v420
          %v422 = vpop.xlane.xlu0 %421
          %v423 = vmax.f32 %v406, %v407
          %424 = vmax.xlane.f32.xlu0 %v423
          %v425 = vpop.xlane.xlu0 %424
          %v426 = vmax.f32 %v408, %v409
          %427 = vmax.xlane.f32.xlu0 %v426
          %v428 = vpop.xlane.xlu0 %427
          %v429 = vmax.f32 %v410, %v411
          %430 = vmax.xlane.f32.xlu0 %v429
          %v431 = vpop.xlane.xlu0 %430
          %v432 = vmax.f32 %v412, %v413
          %433 = vmax.xlane.f32.xlu0 %v432
          %v434 = vpop.xlane.xlu0 %433
          %v435 = vmax.f32 %v414, %v415
          %436 = vmax.xlane.f32.xlu0 %v435
          %v437 = vpop.xlane.xlu0 %436
          %v438 = vmax.f32 %v416, %v417
          %439 = vmax.xlane.f32.xlu0 %v438
          %v440 = vpop.xlane.xlu0 %439
          %v441 = vmax.f32 %v418, %v419
          %442 = vmax.xlane.f32.xlu0 %v441
          %v443 = vpop.xlane.xlu0 %442
          %v444 = vld [vmem:[%s1] sm:$0xff]
          %v445 = vld [vmem:[%s1 + $0x8] sm:$0xff]
          %v446 = vld [vmem:[%s1 + $0x10] sm:$0xff]
          %v447 = vld [vmem:[%s1 + $0x18] sm:$0xff]
          %v448 = vld [vmem:[%s1 + $0x20] sm:$0xff]
          %v449 = vld [vmem:[%s1 + $0x28] sm:$0xff]
          %v450 = vld [vmem:[%s1 + $0x30] sm:$0xff]
          %v451 = vld [vmem:[%s1 + $0x38] sm:$0xff]
          %v460 = vlaneseq
          %v461 = vand.u32 %v460, 127
          %v462 = vlaneseq
          %v463 = vshrl.u32 %v462, 7
          %v464 = vsub.s32 %v461, %v463
          %v465 = vrot.slane %v396, %v464
          %v466 = vadd.s32 %v461, 4294967288
          %v467 = vlaneseq
          %v468 = vshrl.u32 %v467, 7
          %v469 = vsub.s32 %v466, %v468
          %v470 = vrot.slane %v397, %v469
          %vm471 = vcmask 130112
          %v472 = vsel %vm471, %v470, %v465
          %v473 = vadd.s32 %v461, 4294967280
          %v474 = vlaneseq
          %v475 = vshrl.u32 %v474, 7
          %v476 = vsub.s32 %v473, %v475
          %v477 = vrot.slane %v398, %v476
          %vm478 = vcmask 195712
          %v479 = vsel %vm478, %v477, %v472
          %v480 = vadd.s32 %v461, 4294967272
          %v481 = vlaneseq
          %v482 = vshrl.u32 %v481, 7
          %v483 = vsub.s32 %v480, %v482
          %v484 = vrot.slane %v399, %v483
          %vm485 = vcmask 261312
          %v486 = vsel %vm485, %v484, %v479
          %v487 = vadd.s32 %v461, 4294967264
          %v488 = vlaneseq
          %v489 = vshrl.u32 %v488, 7
          %v490 = vsub.s32 %v487, %v489
          %v491 = vrot.slane %v400, %v490
          %vm492 = vcmask 326912
          %v493 = vsel %vm492, %v491, %v486
          %v494 = vadd.s32 %v461, 4294967256
          %v495 = vlaneseq
          %v496 = vshrl.u32 %v495, 7
          %v497 = vsub.s32 %v494, %v496
          %v498 = vrot.slane %v401, %v497
          %vm499 = vcmask 392512
          %v500 = vsel %vm499, %v498, %v493
          %v501 = vadd.s32 %v461, 4294967248
          %v502 = vlaneseq
          %v503 = vshrl.u32 %v502, 7
          %v504 = vsub.s32 %v501, %v503
          %v505 = vrot.slane %v402, %v504
          %vm506 = vcmask 458112
          %v507 = vsel %vm506, %v505, %v500
          %v508 = vadd.s32 %v461, 4294967240
          %v509 = vlaneseq
          %v510 = vshrl.u32 %v509, 7
          %v511 = vsub.s32 %v508, %v510
          %v512 = vrot.slane %v403, %v511
          %vm513 = vcmask 523712
          %v514 = vsel %vm513, %v512, %v507
          %vm515 = vcmask 523264
          %v516 = vsel %vm515, %v514, 0
          %518 = vmatprep.subr.mxu0 0.0
          %519 = vmatpush1.msra.mxu0 %v444
          %520 = vmatprep.subr.mxu0 0.0
          %521 = vmatpush1.msra.mxu0 %v445
          %522 = vmatprep.subr.mxu0 0.0
          %523 = vmatpush1.msra.mxu0 %v446
          %524 = vmatprep.subr.mxu0 0.0
          %525 = vmatpush1.msra.mxu0 %v447
          %526 = vmatprep.subr.mxu0 0.0
          %527 = vmatpush1.msra.mxu0 %v448
          %528 = vmatprep.subr.mxu0 0.0
          %529 = vmatpush1.msra.mxu0 %v449
          %530 = vmatprep.subr.mxu0 0.0
          %531 = vmatpush1.msra.mxu0 %v450
          %532 = vmatprep.subr.mxu0 0.0
          %533 = vmatpush1.msra.mxu0 %v451
          %534 = vmatprep.subr.mxu0 0.0
          %535 = vmatpush1.msra.mxu0 0.0
          %536 = vmatprep.subr.mxu0 0.0
          %537 = vmatpush1.msra.mxu0 0.0
          %538 = vmatprep.subr.mxu0 0.0
          %539 = vmatpush1.msra.mxu0 0.0
          %540 = vmatprep.subr.mxu0 0.0
          %541 = vmatpush1.msra.mxu0 0.0
          %542 = vmatprep.subr.mxu0 0.0
          %543 = vmatpush1.msra.mxu0 0.0
          %544 = vmatprep.subr.mxu0 0.0
          %545 = vmatpush1.msra.mxu0 0.0
          %546 = vmatprep.subr.mxu0 0.0
          %547 = vmatpush1.msra.mxu0 0.0
          %548 = vmatprep.subr.mxu0 0.0
          %549 = vmatpush1.msra.mxu0 0.0
          %550 = vmatprep.subr.mxu0 0.0
          %551 = vmatpush1.msra.mxu0 0.0
          %552 = vmatprep.subr.mxu0 0.0
          %553 = vmatpush1.msra.mxu0 0.0
          %554 = vmatprep.subr.mxu0 0.0
          %555 = vmatpush1.msra.mxu0 0.0
          %556 = vmatprep.subr.mxu0 0.0
          %557 = vmatpush1.msra.mxu0 0.0
          %558 = vmatprep.subr.mxu0 0.0
          %559 = vmatpush1.msra.mxu0 0.0
          %560 = vmatprep.subr.mxu0 0.0
          %561 = vmatpush1.msra.mxu0 0.0
          %562 = vmatprep.subr.mxu0 0.0
          %563 = vmatpush1.msra.mxu0 0.0
          %564 = vmatprep.subr.mxu0 0.0
          %565 = vmatpush1.msra.mxu0 0.0
          %566 = vmatprep.subr.mxu0 0.0
          %567 = vmatpush1.msra.mxu0 0.0
          %568 = vmatprep.subr.mxu0 0.0
          %569 = vmatpush1.msra.mxu0 0.0
          %570 = vmatprep.subr.mxu0 0.0
          %571 = vmatpush1.msra.mxu0 0.0
          %572 = vmatprep.subr.mxu0 0.0
          %573 = vmatpush1.msra.mxu0 0.0
          %574 = vmatprep.subr.mxu0 0.0
          %575 = vmatpush1.msra.mxu0 0.0
          %576 = vmatprep.subr.mxu0 0.0
          %577 = vmatpush1.msra.mxu0 0.0
          %578 = vmatprep.subr.mxu0 0.0
          %579 = vmatpush1.msra.mxu0 0.0
          %580 = vmatprep.subr.mxu0 0.0
          %581 = vmatpush1.msra.mxu0 0.0
          %582 = vmatprep.mubr.f32.mxu0 0.0
          %583 = vmatmul.mubr.f32.gmra.mrb[0].mxu0 %v516
          %v584 = vpop.f32.mrb[0].mxu0
          %v585 = vadd.f32 0.0, %v584
          %v586 = vpop.f32.mrb[0].mxu0
          %587 = vdwg.mxu0
          %v588 = vmax.f32 %v585, 0.0
          %v589 = vld [vmem:[%s2] sm:$0xff]
          %v598 = vlaneseq
          %v599 = vshrl.u32 %v598, 7
          %v600 = vsub.s32 %v461, %v599
          %v601 = vrot.slane %v422, %v600
          %v602 = vlaneseq
          %v603 = vshrl.u32 %v602, 7
          %v604 = vsub.s32 %v466, %v603
          %v605 = vrot.slane %v425, %v604
          %v606 = vsel %vm471, %v605, %v601
          %v607 = vlaneseq
          %v608 = vshrl.u32 %v607, 7
          %v609 = vsub.s32 %v473, %v608
          %v610 = vrot.slane %v428, %v609
          %v611 = vsel %vm478, %v610, %v606
          %v612 = vlaneseq
          %v613 = vshrl.u32 %v612, 7
          %v614 = vsub.s32 %v480, %v613
          %v615 = vrot.slane %v431, %v614
          %v616 = vsel %vm485, %v615, %v611
          %v617 = vlaneseq
          %v618 = vshrl.u32 %v617, 7
          %v619 = vsub.s32 %v487, %v618
          %v620 = vrot.slane %v434, %v619
          %v621 = vsel %vm492, %v620, %v616
          %v622 = vlaneseq
          %v623 = vshrl.u32 %v622, 7
          %v624 = vsub.s32 %v494, %v623
          %v625 = vrot.slane %v437, %v624
          %v626 = vsel %vm499, %v625, %v621
          %v627 = vlaneseq
          %v628 = vshrl.u32 %v627, 7
          %v629 = vsub.s32 %v501, %v628
          %v630 = vrot.slane %v440, %v629
          %v631 = vsel %vm506, %v630, %v626
          %v632 = vlaneseq
          %v633 = vshrl.u32 %v632, 7
          %v634 = vsub.s32 %v508, %v633
          %v635 = vrot.slane %v443, %v634
          %v636 = vsel %vm513, %v635, %v631
          %v637 = vsel %vm515, %v636, 0
          %639 = vmatprep.subr.mxu0 0.0
          %640 = vmatpush1.msra.mxu0 %v444
          %641 = vmatprep.subr.mxu0 0.0
          %642 = vmatpush1.msra.mxu0 %v445
          %643 = vmatprep.subr.mxu0 0.0
          %644 = vmatpush1.msra.mxu0 %v446
          %645 = vmatprep.subr.mxu0 0.0
          %646 = vmatpush1.msra.mxu0 %v447
          %647 = vmatprep.subr.mxu0 0.0
          %648 = vmatpush1.msra.mxu0 %v448
          %649 = vmatprep.subr.mxu0 0.0
          %650 = vmatpush1.msra.mxu0 %v449
          %651 = vmatprep.subr.mxu0 0.0
          %652 = vmatpush1.msra.mxu0 %v450
          %653 = vmatprep.subr.mxu0 0.0
          %654 = vmatpush1.msra.mxu0 %v451
          %655 = vmatprep.subr.mxu0 0.0
          %656 = vmatpush1.msra.mxu0 0.0
          %657 = vmatprep.subr.mxu0 0.0
          %658 = vmatpush1.msra.mxu0 0.0
          %659 = vmatprep.subr.mxu0 0.0
          %660 = vmatpush1.msra.mxu0 0.0
          %661 = vmatprep.subr.mxu0 0.0
          %662 = vmatpush1.msra.mxu0 0.0
          %663 = vmatprep.subr.mxu0 0.0
          %664 = vmatpush1.msra.mxu0 0.0
          %665 = vmatprep.subr.mxu0 0.0
          %666 = vmatpush1.msra.mxu0 0.0
          %667 = vmatprep.subr.mxu0 0.0
          %668 = vmatpush1.msra.mxu0 0.0
          %669 = vmatprep.subr.mxu0 0.0
          %670 = vmatpush1.msra.mxu0 0.0
          %671 = vmatprep.subr.mxu0 0.0
          %672 = vmatpush1.msra.mxu0 0.0
          %673 = vmatprep.subr.mxu0 0.0
          %674 = vmatpush1.msra.mxu0 0.0
          %675 = vmatprep.subr.mxu0 0.0
          %676 = vmatpush1.msra.mxu0 0.0
          %677 = vmatprep.subr.mxu0 0.0
          %678 = vmatpush1.msra.mxu0 0.0
          %679 = vmatprep.subr.mxu0 0.0
          %680 = vmatpush1.msra.mxu0 0.0
          %681 = vmatprep.subr.mxu0 0.0
          %682 = vmatpush1.msra.mxu0 0.0
          %683 = vmatprep.subr.mxu0 0.0
          %684 = vmatpush1.msra.mxu0 0.0
          %685 = vmatprep.subr.mxu0 0.0
          %686 = vmatpush1.msra.mxu0 0.0
          %687 = vmatprep.subr.mxu0 0.0
          %688 = vmatpush1.msra.mxu0 0.0
          %689 = vmatprep.subr.mxu0 0.0
          %690 = vmatpush1.msra.mxu0 0.0
          %691 = vmatprep.subr.mxu0 0.0
          %692 = vmatpush1.msra.mxu0 0.0
          %693 = vmatprep.subr.mxu0 0.0
          %694 = vmatpush1.msra.mxu0 0.0
          %695 = vmatprep.subr.mxu0 0.0
          %696 = vmatpush1.msra.mxu0 0.0
          %697 = vmatprep.subr.mxu0 0.0
          %698 = vmatpush1.msra.mxu0 0.0
          %699 = vmatprep.subr.mxu0 0.0
          %700 = vmatpush1.msra.mxu0 0.0
          %701 = vmatprep.subr.mxu0 0.0
          %702 = vmatpush1.msra.mxu0 0.0
          %703 = vmatprep.mubr.f32.mxu0 0.0
          %704 = vmatmul.mubr.f32.gmra.mrb[0].mxu0 %v637
          %v705 = vpop.f32.mrb[0].mxu0
          %v706 = vadd.f32 0.0, %v705
          %v707 = vpop.f32.mrb[0].mxu0
          %708 = vdwg.mxu0
          %v709 = vmax.f32 %v706, 0.0
          %vm710 = vcmask 64512
          %v712 = vsel %vm710, %v709, 0
          %714 = vmatprep.subr.mxu0 0.0
          %715 = vmatpush1.msra.mxu0 %v589
          %716 = vmatprep.subr.mxu0 0.0
          %717 = vmatpush1.msra.mxu0 0.0
          %718 = vmatprep.subr.mxu0 0.0
          %719 = vmatpush1.msra.mxu0 0.0
          %720 = vmatprep.subr.mxu0 0.0
          %721 = vmatpush1.msra.mxu0 0.0
          %722 = vmatprep.subr.mxu0 0.0
          %723 = vmatpush1.msra.mxu0 0.0
          %724 = vmatprep.subr.mxu0 0.0
          %725 = vmatpush1.msra.mxu0 0.0
          %726 = vmatprep.subr.mxu0 0.0
          %727 = vmatpush1.msra.mxu0 0.0
          %728 = vmatprep.subr.mxu0 0.0
          %729 = vmatpush1.msra.mxu0 0.0
          %730 = vmatprep.subr.mxu0 0.0
          %731 = vmatpush1.msra.mxu0 0.0
          %732 = vmatprep.subr.mxu0 0.0
          %733 = vmatpush1.msra.mxu0 0.0
          %734 = vmatprep.subr.mxu0 0.0
          %735 = vmatpush1.msra.mxu0 0.0
          %736 = vmatprep.subr.mxu0 0.0
          %737 = vmatpush1.msra.mxu0 0.0
          %738 = vmatprep.subr.mxu0 0.0
          %739 = vmatpush1.msra.mxu0 0.0
          %740 = vmatprep.subr.mxu0 0.0
          %741 = vmatpush1.msra.mxu0 0.0
          %742 = vmatprep.subr.mxu0 0.0
          %743 = vmatpush1.msra.mxu0 0.0
          %744 = vmatprep.subr.mxu0 0.0
          %745 = vmatpush1.msra.mxu0 0.0
          %746 = vmatprep.subr.mxu0 0.0
          %747 = vmatpush1.msra.mxu0 0.0
          %748 = vmatprep.subr.mxu0 0.0
          %749 = vmatpush1.msra.mxu0 0.0
          %750 = vmatprep.subr.mxu0 0.0
          %751 = vmatpush1.msra.mxu0 0.0
          %752 = vmatprep.subr.mxu0 0.0
          %753 = vmatpush1.msra.mxu0 0.0
          %754 = vmatprep.subr.mxu0 0.0
          %755 = vmatpush1.msra.mxu0 0.0
          %756 = vmatprep.subr.mxu0 0.0
          %757 = vmatpush1.msra.mxu0 0.0
          %758 = vmatprep.subr.mxu0 0.0
          %759 = vmatpush1.msra.mxu0 0.0
          %760 = vmatprep.subr.mxu0 0.0
          %761 = vmatpush1.msra.mxu0 0.0
          %762 = vmatprep.subr.mxu0 0.0
          %763 = vmatpush1.msra.mxu0 0.0
          %764 = vmatprep.subr.mxu0 0.0
          %765 = vmatpush1.msra.mxu0 0.0
          %766 = vmatprep.subr.mxu0 0.0
          %767 = vmatpush1.msra.mxu0 0.0
          %768 = vmatprep.subr.mxu0 0.0
          %769 = vmatpush1.msra.mxu0 0.0
          %770 = vmatprep.subr.mxu0 0.0
          %771 = vmatpush1.msra.mxu0 0.0
          %772 = vmatprep.subr.mxu0 0.0
          %773 = vmatpush1.msra.mxu0 0.0
          %774 = vmatprep.subr.mxu0 0.0
          %775 = vmatpush1.msra.mxu0 0.0
          %776 = vmatprep.subr.mxu0 0.0
          %777 = vmatpush1.msra.mxu0 0.0
          %778 = vmatprep.mubr.f32.mxu0 0.0
          %779 = vmatmul.mubr.f32.gmra.mrb[0].mxu0 %v712
          %v780 = vpop.f32.mrb[0].mxu0
          %v781 = vadd.f32 0.0, %v780
          %v782 = vpop.f32.mrb[0].mxu0
          %783 = vdwg.mxu0
          %v785 = vsel %vm710, %v588, 0
          %787 = vmatprep.subr.mxu0 0.0
          %788 = vmatpush1.msra.mxu0 %v589
          %789 = vmatprep.subr.mxu0 0.0
          %790 = vmatpush1.msra.mxu0 0.0
          %791 = vmatprep.subr.mxu0 0.0
          %792 = vmatpush1.msra.mxu0 0.0
          %793 = vmatprep.subr.mxu0 0.0
          %794 = vmatpush1.msra.mxu0 0.0
          %795 = vmatprep.subr.mxu0 0.0
          %796 = vmatpush1.msra.mxu0 0.0
          %797 = vmatprep.subr.mxu0 0.0
          %798 = vmatpush1.msra.mxu0 0.0
          %799 = vmatprep.subr.mxu0 0.0
          %800 = vmatpush1.msra.mxu0 0.0
          %801 = vmatprep.subr.mxu0 0.0
          %802 = vmatpush1.msra.mxu0 0.0
          %803 = vmatprep.subr.mxu0 0.0
          %804 = vmatpush1.msra.mxu0 0.0
          %805 = vmatprep.subr.mxu0 0.0
          %806 = vmatpush1.msra.mxu0 0.0
          %807 = vmatprep.subr.mxu0 0.0
          %808 = vmatpush1.msra.mxu0 0.0
          %809 = vmatprep.subr.mxu0 0.0
          %810 = vmatpush1.msra.mxu0 0.0
          %811 = vmatprep.subr.mxu0 0.0
          %812 = vmatpush1.msra.mxu0 0.0
          %813 = vmatprep.subr.mxu0 0.0
          %814 = vmatpush1.msra.mxu0 0.0
          %815 = vmatprep.subr.mxu0 0.0
          %816 = vmatpush1.msra.mxu0 0.0
          %817 = vmatprep.subr.mxu0 0.0
          %818 = vmatpush1.msra.mxu0 0.0
          %819 = vmatprep.subr.mxu0 0.0
          %820 = vmatpush1.msra.mxu0 0.0
          %821 = vmatprep.subr.mxu0 0.0
          %822 = vmatpush1.msra.mxu0 0.0
          %823 = vmatprep.subr.mxu0 0.0
          %824 = vmatpush1.msra.mxu0 0.0
          %825 = vmatprep.subr.mxu0 0.0
          %826 = vmatpush1.msra.mxu0 0.0
          %827 = vmatprep.subr.mxu0 0.0
          %828 = vmatpush1.msra.mxu0 0.0
          %829 = vmatprep.subr.mxu0 0.0
          %830 = vmatpush1.msra.mxu0 0.0
          %831 = vmatprep.subr.mxu0 0.0
          %832 = vmatpush1.msra.mxu0 0.0
          %833 = vmatprep.subr.mxu0 0.0
          %834 = vmatpush1.msra.mxu0 0.0
          %835 = vmatprep.subr.mxu0 0.0
          %836 = vmatpush1.msra.mxu0 0.0
          %837 = vmatprep.subr.mxu0 0.0
          %838 = vmatpush1.msra.mxu0 0.0
          %839 = vmatprep.subr.mxu0 0.0
          %840 = vmatpush1.msra.mxu0 0.0
          %841 = vmatprep.subr.mxu0 0.0
          %842 = vmatpush1.msra.mxu0 0.0
          %843 = vmatprep.subr.mxu0 0.0
          %844 = vmatpush1.msra.mxu0 0.0
          %845 = vmatprep.subr.mxu0 0.0
          %846 = vmatpush1.msra.mxu0 0.0
          %847 = vmatprep.subr.mxu0 0.0
          %848 = vmatpush1.msra.mxu0 0.0
          %849 = vmatprep.subr.mxu0 0.0
          %850 = vmatpush1.msra.mxu0 0.0
          %851 = vmatprep.mubr.f32.mxu0 0.0
          %852 = vmatmul.mubr.f32.gmra.mrb[0].mxu0 %v785
          %v853 = vpop.f32.mrb[0].mxu0
          %v854 = vadd.f32 %v781, %v853
          %v855 = vpop.f32.mrb[0].mxu0
          %856 = vdwg.mxu0
          %v857 = vsub.f32 0.0, %v854
          %v858 = vmul.f32 %v857, 1.442695
          %v859 = vpow.pop %v858
          %v860 = vadd.f32 %v859, 1.0
          %v861 = vrcp.pop %v860
          %vm862 = vcmask 516096
          %863 = vst.msk [vmem:[%s203] sm:$0x1] %vm862, %v861
        $region44: #{tpu_custom_call.1} parent=31 // pred_fallthru
          _
        %s864 = sand.u32 %s110, 1
        %s865 = scalar_lea.sflag [#allocation6], %s864
        %s866 = sand.u32 %s110, 1
        %s867 = scalar_lea.vmem [#allocation7], %s866
        // Predicated region
        $region45: #{tpu_custom_call.1} parent=31 // pred_check
          %p868 = pneg %p120
        $region46: #{tpu_custom_call.1} parent=31 // pred_check_branch
          %870 = sbr.rel (%p868) target = $region48
        $region47: #{tpu_custom_call.1} parent=31 // pred_region
          %s872 = ssub.s32 16, 16
          %873 = vsyncadd %s865, %s872
          %s874 = smul.addr %s24, 16
          %s875 = scalar_lea.hbm %s3, %s874
          %s877 = sshll.u32 %s867, 4
          %s878 = int_to_ptr.vmem [resolvable:$true] %s877
          %880 = dma.vmem_to_hbm [thread:$0]  %s878, 16, %s875, %s865
        $region48: #{tpu_custom_call.1} parent=31 // pred_fallthru
          _
      $region32: #{tpu_custom_call.1} parent=5 // pred_fallthru
        _
      %p881 = scmp.le.s32.totalorder 2, %s15
      // Predicated region
      $region49: #{tpu_custom_call.1} parent=5 // pred_check
        %p882 = pneg %p881
      $region50: #{tpu_custom_call.1} parent=5 // pred_check_branch
        %884 = sbr.rel (%p882) target = $region52
      $region51: #{tpu_custom_call.1} parent=5 // pred_region
        %s885 = ssub.s32 %s15, 2
        // Predicated region
        $region53: #{tpu_custom_call.1} parent=51 // pred_check
          %p886 = pneg %p126
        $region54: #{tpu_custom_call.1} parent=51 // pred_check_branch
          %888 = sbr.rel (%p886) target = $region56
        $region55: #{tpu_custom_call.1} parent=51 // pred_region
          %s889 = sand.u32 %s111, 1
          %s890 = scalar_lea.sflag [#allocation6], %s889
          %s891 = sand.u32 %s111, 1
          %s892 = scalar_lea.vmem [#allocation7], %s891
          %893 = dma.done %s890, 16
        $region56: #{tpu_custom_call.1} parent=51 // pred_fallthru
          _
      $region52: #{tpu_custom_call.1} parent=5 // pred_fallthru
        _
    $region6: #{tpu_custom_call.1} parent=1 // loop_footer
      %s19 = sadd.s32 1, %s15
    $region7: #{tpu_custom_call.1} parent=1 // loop_footer_branch
      %14 = sbr.rel target = $region3
    $region8: #{tpu_custom_call.1} parent=1 // loop_exit
      _
    %894 = vsyncpa [#allocation5], 1
    %s895 = scalar_lea.sflag [#allocation5], 1
    %896 = vsyncpa %s895, 1
    %897 = vsyncpa [#allocation6], 1
    %s898 = scalar_lea.sflag [#allocation6], 1
    %899 = vsyncpa %s898, 1

</llo_original>
